<compile_context>
chip_gen: v5e
topology: v5e:2x2
jax: 0.10.0
libtpu: 0.0.40
codegen_flags: <defaults>
</compile_context>

<pallas_src>
import functools

import jax
import jax.numpy as jnp
from jax.experimental import pallas as pl
from jax.experimental.pallas import tpu as pltpu

_LANE = 128
_SUBLANE = 8


def _vmem_limit_bytes():
    """Generation-aware scoped-VMEM limit (bytes)."""
    try:
        cap = pltpu.get_tpu_info().vmem_capacity_bytes
    except Exception:                    # chip query unavailable -> safe value
        cap = 64 * 1024 * 1024
    if cap >= 100 * 1024 * 1024:         # v5e / v6e: 128 MiB physical VMEM
        return 96 * 1024 * 1024
    return 48 * 1024 * 1024              # v7x: 64 MiB physical VMEM


def _snap_tile(n, t, align):
    t = int(t)
    if t >= n:
        return n                         # full-extent block is always legal
    t = max(align, (t // align) * align)
    return n if t >= n else t


def _auto_tile(n, c, in_itemsize, out_itemsize, tile_out, vmem_limit, align):
    """Rows per tile, sized from the actual live-buffer footprint.

    Per row we keep: 2x double-buffered input, 2x double-buffered output
    ('none' only) and ~8 f32 elementwise temporaries inside the kernel; half
    the scoped limit is left as headroom for compiler scratch.
    """
    per_row = c * (2 * in_itemsize
                   + (2 * out_itemsize if tile_out else 0)
                   + 8 * 4)
    t = (vmem_limit // 2) // max(per_row, 1)
    # TODO(synk): for vocabulary-scale C this floors at `align` rows; a class-
    # axis (online-softmax) tiling pass would restore large row tiles there.
    return _snap_tile(n, t, align)


def _focal_power(x, gamma):
    """x**gamma, specialized to a VPU multiply chain for small integer gamma."""
    g = float(gamma)
    if g == round(g) and 0.0 <= g <= 8.0:
        gi = int(round(g))
        if gi == 0:
            return jnp.ones_like(x)
        out = x
        for _ in range(gi - 1):          # gamma==2 (default) -> one extra vmul
            out = out * x
        return out
    return x ** g                        # generic float pow (EUP exp/log)


def _focal_core(logits, targets, *, alpha, gamma, class_axis, elementwise):
    """Focal loss for one VMEM tile, all math in f32.

    class_axis holds the C classes (1 for the (rows, C) layout, 0 for the
    lane-dense (C, cols) layout).  Returns the per-element loss tile when
    `elementwise`, else the loss reduced over the class axis (keepdims=True).
    """
    x = logits.astype(jnp.float32)
    cls = jax.lax.broadcasted_iota(jnp.int32, x.shape, class_axis)
    is_tgt = cls == targets

    # softmax over classes; row reciprocal instead of a broadcast divide.
    m = jnp.max(x, axis=class_axis, keepdims=True)
    e = jnp.exp(x - m)
    inv = pl.reciprocal(jnp.sum(e, axis=class_axis, keepdims=True), approx=False)
    p = e * inv

    if float(alpha) < 0:
        # at = class_mask * (-alpha): nonzero only at the target column, so do
        # clip/log/pow on a per-row vector instead of the full (rows, C) tile.
        pt_t = jnp.sum(jnp.where(is_tgt, p, 0.0), axis=class_axis, keepdims=True)
        pt_t = jnp.clip(pt_t, 1e-4, 1.0 - 1e-4)
        # loss = -(-alpha) * focal * log(pt) = alpha * focal * log(pt)
        row_loss = float(alpha) * _focal_power(1.0 - pt_t, gamma) * jnp.log(pt_t)
        if elementwise:
            return jnp.where(is_tgt, row_loss, jnp.float32(0.0))
        return row_loss

    pt = jnp.where(is_tgt, p, 1.0 - p)
    pt = jnp.clip(pt, 1e-4, 1.0 - 1e-4)
    loss = (-float(alpha)) * _focal_power(1.0 - pt, gamma) * jnp.log(pt)
    if elementwise:
        return loss
    return jnp.sum(loss, axis=class_axis, keepdims=True)


def _focal_none_kernel(logits_ref, targets_ref, out_ref, *, alpha, gamma,
                       class_axis):
    loss = _focal_core(logits_ref[...], targets_ref[...], alpha=alpha,
                       gamma=gamma, class_axis=class_axis, elementwise=True)
    out_ref[...] = loss.astype(out_ref.dtype)


def _focal_partial_kernel(logits_ref, targets_ref, out_ref, *, alpha, gamma,
                          class_axis, row_axis, n, tile, need_mask):
    row_loss = _focal_core(logits_ref[...], targets_ref[...], alpha=alpha,
                           gamma=gamma, class_axis=class_axis,
                           elementwise=False)
    if need_mask:
        # Padded rows of the last tile hold uninitialized VMEM; jnp.where is a
        # select, so NaN/Inf from the dead branch never reaches the sum.
        idx = (jax.lax.broadcasted_iota(jnp.int32, row_loss.shape, row_axis)
               + pl.program_id(0) * tile)
        row_loss = jnp.where(idx < n, row_loss, jnp.float32(0.0))
    part = jnp.sum(row_loss, axis=1, keepdims=True)
    part = jnp.sum(part, axis=0, keepdims=True)          # (1, 1)
    out_ref[...] = part


def focal_loss(inputs, targets, alpha=1.0, gamma=2.0, reduction='mean',
               tile_n=None):
    """Pallas TPU implementation of FocalLoss.forward.

    inputs:  (N, C) float logits (any float dtype; math is f32 in-kernel)
    targets: (N,)   integer class indices
    """
    n, c = inputs.shape
    lane_dense = c < _LANE               # small C: put the big row axis on lanes
    vmem_limit = _vmem_limit_bytes()
    in_it = jnp.dtype(inputs.dtype).itemsize
    align = _LANE if lane_dense else _SUBLANE
    tile_out = (reduction == 'none')

    if tile_n is None:
        tile = _auto_tile(n, c, in_it, in_it, tile_out, vmem_limit, align)
    else:
        tile = _snap_tile(n, tile_n, align)

    grid = (pl.cdiv(n, tile),)
    tgt = targets.astype(jnp.int32)

    if lane_dense:
        logits = inputs.T                # (C, N): rows on the lane axis
        tgt = tgt.reshape(1, n)
        class_axis, row_axis = 0, 1
        in_specs = [pl.BlockSpec((c, tile), lambda i: (0, i)),
                    pl.BlockSpec((1, tile), lambda i: (0, i))]
        none_out_spec = pl.BlockSpec((c, tile), lambda i: (0, i))
        none_out_shape = jax.ShapeDtypeStruct((c, n), inputs.dtype)
    else:
        logits = inputs
        tgt = tgt.reshape(n, 1)
        class_axis, row_axis = 1, 0
        in_specs = [pl.BlockSpec((tile, c), lambda i: (i, 0)),
                    pl.BlockSpec((tile, 1), lambda i: (i, 0))]
        none_out_spec = pl.BlockSpec((tile, c), lambda i: (i, 0))
        none_out_shape = jax.ShapeDtypeStruct((n, c), inputs.dtype)

    params = pltpu.CompilerParams(dimension_semantics=("parallel",),
                                  vmem_limit_bytes=vmem_limit)
    common = dict(alpha=float(alpha), gamma=float(gamma), class_axis=class_axis)

    if reduction == 'none':
        kernel = functools.partial(_focal_none_kernel, **common)
        out = pl.pallas_call(
            kernel, grid=grid, in_specs=in_specs, out_specs=none_out_spec,
            out_shape=none_out_shape, compiler_params=params,
        )(logits, tgt)
        return out.T if lane_dense else out

    num_tiles = grid[0]
    kernel = functools.partial(
        _focal_partial_kernel, row_axis=row_axis, n=n, tile=tile,
        need_mask=(n % tile != 0), **common)
    partials = pl.pallas_call(
        kernel, grid=grid, in_specs=in_specs,
        out_specs=pl.BlockSpec((1, 1), lambda i: (i, 0)),
        out_shape=jax.ShapeDtypeStruct((num_tiles, 1), jnp.float32),
        compiler_params=params,
    )(logits, tgt)
    total = jnp.sum(partials)            # tiny final reduce in XLA
    if reduction == 'sum':
        return total
    return total / jnp.float32(n * c)    # 'mean'


def _focal_loss_ref(inputs, targets, alpha=1.0, gamma=2.0, reduction='mean'):
    """Pure-JAX reference mirroring the PyTorch module."""
    n, c = inputs.shape
    p = jax.nn.softmax(inputs.astype(jnp.float32), axis=1)
    class_mask = jax.nn.one_hot(targets, c, dtype=jnp.float32)
    at = alpha if alpha >= 0 else class_mask * -alpha
    pt = p * class_mask + (1 - p) * (1 - class_mask)
    pt = jnp.clip(pt, 1e-4, 1 - 1e-4)
    loss = -at * (1 - pt) ** gamma * jnp.log(pt)
    if reduction == 'mean':
        return loss.mean()
    elif reduction == 'sum':
        return loss.sum()
    return loss


if __name__ == "__main__":
    key = jax.random.PRNGKey(0)
    k_in, k_tgt, k_in2, k_tgt2, k_in3, k_tgt3 = jax.random.split(key, 6)

    # Small example consistent with the module: batch=8, classes=16.
    N, C = 8, 16
    inputs = jax.random.normal(k_in, (N, C), dtype=jnp.float32)
    targets = jax.random.randint(k_tgt, (N,), 0, C, dtype=jnp.int32)

    # mean (default module config: alpha=1, gamma=2) — lane-dense path.
    out = jax.block_until_ready(focal_loss(inputs, targets, 1.0, 2.0, 'mean'))
    ref = _focal_loss_ref(inputs, targets, 1.0, 2.0, 'mean')
    assert jnp.allclose(out, ref, rtol=1e-5, atol=1e-6), (out, ref)

    # sum
    out = jax.block_until_ready(focal_loss(inputs, targets, 1.0, 2.0, 'sum'))
    ref = _focal_loss_ref(inputs, targets, 1.0, 2.0, 'sum')
    assert jnp.allclose(out, ref, rtol=1e-5, atol=1e-5), (out, ref)

    # 'none' + negative-alpha branch (per-class alpha weighting).
    out = jax.block_until_ready(focal_loss(inputs, targets, -0.25, 2.0, 'none'))
    ref = _focal_loss_ref(inputs, targets, -0.25, 2.0, 'none')
    assert jnp.allclose(out, ref, rtol=1e-5, atol=1e-6), (out, ref)

    # Gridded lane-dense path with a padded last tile (N not multiple of tile).
    N2, C2 = 200, 16
    inputs2 = jax.random.normal(k_in2, (N2, C2), dtype=jnp.float32)
    targets2 = jax.random.randint(k_tgt2, (N2,), 0, C2, dtype=jnp.int32)
    out = jax.block_until_ready(
        focal_loss(inputs2, targets2, 1.0, 2.0, 'mean', tile_n=128))
    ref = _focal_loss_ref(inputs2, targets2, 1.0, 2.0, 'mean')
    assert jnp.allclose(out, ref, rtol=1e-5, atol=1e-6), (out, ref)

    out = jax.block_until_ready(
        focal_loss(inputs2, targets2, 1.0, 2.0, 'none', tile_n=128))
    ref = _focal_loss_ref(inputs2, targets2, 1.0, 2.0, 'none')
    assert jnp.allclose(out, ref, rtol=1e-5, atol=1e-6), (out, ref)

    # Wide-class case exercises the natural (N, C) row layout (C >= 128).
    N3, C3 = 64, 128
    inputs3 = jax.random.normal(k_in3, (N3, C3), dtype=jnp.float32)
    targets3 = jax.random.randint(k_tgt3, (N3,), 0, C3, dtype=jnp.int32)
    out = jax.block_until_ready(focal_loss(inputs3, targets3, 1.0, 2.0, 'mean'))
    ref = _focal_loss_ref(inputs3, targets3, 1.0, 2.0, 'mean')
    assert jnp.allclose(out, ref, rtol=1e-5, atol=1e-6), (out, ref)
    out = jax.block_until_ready(focal_loss(inputs3, targets3, -0.5, 2.0, 'none'))
    ref = _focal_loss_ref(inputs3, targets3, -0.5, 2.0, 'none')
    assert jnp.allclose(out, ref, rtol=1e-5, atol=1e-6), (out, ref)

    print("KERNEL_OK")
</pallas_src>

<mosaic_0001>
module attributes {stable_mosaic.version = 11 : i64} {
  func.func @_focal_partial_kernel(%arg0: i32, %arg1: memref<16x8xf32, #tpu.memory_space<vmem>>, %arg2: memref<1x8xi32, #tpu.memory_space<vmem>>, %arg3: memref<1x1xf32, #tpu.memory_space<vmem>>) attributes {dimension_semantics = [#tpu.dimension_semantics<parallel>], iteration_bounds = array<i64: 1>, scalar_prefetch = 0 : i64, scratch_operands = 0 : i64, tpu.core_type = #tpu.core_type<tc>, window_params = [{transform_indices = @transform_0, window_bounds = array<i64: 16, 8>}, {transform_indices = @transform_1, window_bounds = array<i64: 1, 8>}, {transform_indices = @transform_2, window_bounds = array<i64: 1, 1>}]} {
    %c0 = arith.constant 0 : index
    %c0_0 = arith.constant 0 : index
    %0 = vector.load %arg1[%c0, %c0_0] : memref<16x8xf32, #tpu.memory_space<vmem>>, vector<16x8xf32>
    %c0_1 = arith.constant 0 : index
    %c0_2 = arith.constant 0 : index
    %1 = vector.load %arg2[%c0_1, %c0_2] : memref<1x8xi32, #tpu.memory_space<vmem>>, vector<1x8xi32>
    %2 = tpu.iota {dimensions = array<i32: 0>} : vector<16x8xi32>
    %3 = vector.broadcast %1 : vector<1x8xi32> to vector<16x8xi32>
    %4 = arith.cmpi eq, %2, %3 : vector<16x8xi32>
    %cst = arith.constant dense<0xFF800000> : vector<8xf32>
    %5 = vector.multi_reduction <maximumf>, %0, %cst [0] : vector<16x8xf32> to vector<8xf32>
    %6 = vector.shape_cast %5 : vector<8xf32> to vector<1x8xf32>
    %7 = vector.broadcast %6 : vector<1x8xf32> to vector<16x8xf32>
    %8 = arith.subf %0, %7 : vector<16x8xf32>
    %9 = math.exp %8 : vector<16x8xf32>
    %cst_3 = arith.constant dense<0.000000e+00> : vector<8xf32>
    %10 = vector.multi_reduction <add>, %9, %cst_3 [0] : vector<16x8xf32> to vector<8xf32>
    %11 = vector.shape_cast %10 : vector<8xf32> to vector<1x8xf32>
    %12 = tpu.reciprocal %11 : vector<1x8xf32> -> vector<1x8xf32>
    %13 = vector.broadcast %12 : vector<1x8xf32> to vector<16x8xf32>
    %14 = arith.mulf %9, %13 : vector<16x8xf32>
    %cst_4 = arith.constant 1.000000e+00 : f32
    %15 = vector.broadcast %cst_4 : f32 to vector<16x8xf32>
    %16 = arith.subf %15, %14 : vector<16x8xf32>
    %17 = arith.select %4, %14, %16 : vector<16x8xi1>, vector<16x8xf32>
    %cst_5 = arith.constant 9.99999974E-5 : f32
    %cst_6 = arith.constant 0.999899983 : f32
    %18 = vector.broadcast %cst_5 : f32 to vector<16x8xf32>
    %19 = arith.maximumf %18, %17 : vector<16x8xf32>
    %20 = vector.broadcast %cst_6 : f32 to vector<16x8xf32>
    %21 = arith.minimumf %20, %19 : vector<16x8xf32>
    %cst_7 = arith.constant 1.000000e+00 : f32
    %22 = vector.broadcast %cst_7 : f32 to vector<16x8xf32>
    %23 = arith.subf %22, %21 : vector<16x8xf32>
    %24 = arith.mulf %23, %23 : vector<16x8xf32>
    %cst_8 = arith.constant -1.000000e+00 : f32
    %25 = vector.broadcast %cst_8 : f32 to vector<16x8xf32>
    %26 = arith.mulf %25, %24 : vector<16x8xf32>
    %27 = math.log %21 : vector<16x8xf32>
    %28 = arith.mulf %26, %27 : vector<16x8xf32>
    %cst_9 = arith.constant dense<0.000000e+00> : vector<8xf32>
    %29 = vector.multi_reduction <add>, %28, %cst_9 [0] : vector<16x8xf32> to vector<8xf32>
    %30 = vector.shape_cast %29 : vector<8xf32> to vector<1x8xf32>
    %cst_10 = arith.constant dense<0.000000e+00> : vector<1xf32>
    %31 = vector.multi_reduction <add>, %30, %cst_10 [1] : vector<1x8xf32> to vector<1xf32>
    %32 = vector.shape_cast %31 : vector<1xf32> to vector<1x1xf32>
    %cst_11 = arith.constant dense<0.000000e+00> : vector<1xf32>
    %33 = vector.multi_reduction <add>, %32, %cst_11 [0] : vector<1x1xf32> to vector<1xf32>
    %34 = vector.shape_cast %33 : vector<1xf32> to vector<1x1xf32>
    %c0_12 = arith.constant 0 : index
    %c0_13 = arith.constant 0 : index
    %35 = vector.load %arg3[%c0_12, %c0_13] : memref<1x1xf32, #tpu.memory_space<vmem>>, vector<1x1xf32>
    tpu.vector_store %arg3[%c0_12, %c0_13], %34 {strides = array<i32>} : memref<1x1xf32, #tpu.memory_space<vmem>>, vector<1x1xf32>,
    return
  }
  func.func @transform_0(%arg0: i32) -> (i32, i32) {
    %c0_i32 = arith.constant 0 : i32
    %c0_i32_0 = arith.constant 0 : i32
    return %c0_i32, %arg0 : i32, i32
  }
  func.func @transform_1(%arg0: i32) -> (i32, i32) {
    %c0_i32 = arith.constant 0 : i32
    %c0_i32_0 = arith.constant 0 : i32
    return %c0_i32, %arg0 : i32, i32
  }
  func.func @transform_2(%arg0: i32) -> (i32, i32) {
    %c0_i32 = arith.constant 0 : i32
    %c0_i32_0 = arith.constant 0 : i32
    return %arg0, %c0_i32 : i32, i32
  }
}

</mosaic_0001>

<llo_original>
// kernel: tpu_custom_call.1
$region0: #{tpu_custom_call.1}
  #allocation0 [shape = 'u32[]', space=smem, size = 0x4, offset = 0x4, fixed_abs, tag = 'smem constant byte address 0x4 - core index']
  #allocation1 [shape = 'u32[72,128]{1,0:T(1,128)}', space=vmem, size = 0x9000, scoped, tag = 'internal scratch']
  %s0 = inlined_call_operand.vmem [shape: f32[16,8], index: 0, kind: input, shape index: {}]
  %s1 = inlined_call_operand.vmem [shape: s32[1,8], index: 1, kind: input, shape index: {}]
  %s2 = inlined_call_operand.hbm [shape: f32[1,1], index: 2, kind: output, shape index: {}]
  %s3 = sld [smem:[#allocation0]]
  $region18: #{tpu_custom_call.1} parent=0
    _
  %s5 = ssub.s32 1, %s3
  %s6 = scalar_select 0, %s5, %s3
  $region1: #{tpu_custom_call.1} parent=0
    #allocation2 [shape = 'u8[512]{0}', space=vmem, size = 0x400, scoped, tag = 'output window, operand 0, single buffered']
    #allocation3 [shape = 's32[1]{0}', space=sflag, size = 0x4, scoped, tag = 'scoped memory for tpu_custom_call.1']
    %7 = vsyncpa [#allocation3], 0
    // Predicated region
    $region2: #{tpu_custom_call.1} parent=1 // pred_check
      _
    $region3: #{tpu_custom_call.1} parent=1 // pred_check_branch
      %9 = sbr.rel (0) target = $region5
    $region4: #{tpu_custom_call.1} parent=1 // pred_region
      _
    $region5: #{tpu_custom_call.1} parent=1 // pred_fallthru
      _
    // Predicated region
    $region6: #{tpu_custom_call.1} parent=1 // pred_check
      _
    $region7: #{tpu_custom_call.1} parent=1 // pred_check_branch
      %11 = sbr.rel (0) target = $region9
    $region8: #{tpu_custom_call.1} parent=1 // pred_region
      _
    $region9: #{tpu_custom_call.1} parent=1 // pred_fallthru
      _
    %v12 = vld [vmem:[%s0] sm:$0xff]
    %v13 = vld [vmem:[%s0 + $0x8] sm:$0xff]
    %v14 = vld [vmem:[%s1] sm:$0x1]
    %v15 = vlaneseq
    %v16 = vshrl.u32 %v15, 7
    %v17 = vadd.s32 %v16, 8
    %v18 = vperm.slane %v14, 0
    %vm19 = vcmp.eq.s32.totalorder %v16, %v18
    %vm20 = vcmp.eq.s32.totalorder %v17, %v18
    %vm21 = vcmask 64512
    %v22 = vsel %vm21, %v12, -inf
    %v23 = vsel %vm21, %v13, -inf
    %v24 = vmax.f32 %v22, %v23
    %v25 = vrot.slane %v24, 4
    %v26 = vmax.f32 %v24, %v25
    %v27 = vrot.slane %v26, 2
    %v28 = vmax.f32 %v26, %v27
    %v29 = vrot.slane %v28, 1
    %v30 = vmax.f32 %v28, %v29
    %v31 = vsub.f32 %v12, %v30
    %v32 = vsub.f32 %v13, %v30
    %v33 = vmul.f32 %v31, 1.442695
    %v34 = vpow.pop %v33
    %v35 = vmul.f32 %v32, 1.442695
    %v36 = vpow.pop %v35
    %v37 = vsel %vm21, %v34, 0.0
    %v38 = vsel %vm21, %v36, 0.0
    %v39 = vadd.f32 %v37, %v38
    %v40 = vrot.slane %v39, 4
    %v41 = vadd.f32 %v39, %v40
    %v42 = vrot.slane %v41, 2
    %v43 = vadd.f32 %v41, %v42
    %v44 = vrot.slane %v43, 1
    %v45 = vadd.f32 %v43, %v44
    %v46 = vrcp.pop %v45
    %v47 = vmul.f32 %v45, %v46
    %v48 = vsub.f32 1.0, %v47
    %v49 = vmul.f32 %v46, %v48
    %v50 = vadd.f32 %v46, %v49
    %vm51 = vweird.f32 %v45
    %vm52 = vweird.f32 %v46
    %vm53 = vmor %vm51, %vm52
    %v54 = vsel %vm53, %v46, %v50
    %v55 = vand.u32 2147483647, %v45
    %vm56 = vcmp.eq.f32.partialorder %v55, 8.507059e+37
    %v57 = vand.u32 %v45, 2147483648
    %v58 = vor.u32 1.1754944e-38, %v57
    %v59 = vsel %vm56, %v58, %v54
    %v60 = vmul.f32 %v34, %v59
    %v61 = vmul.f32 %v36, %v59
    %v62 = vsub.f32 1.0, %v60
    %v63 = vsub.f32 1.0, %v61
    %v64 = vsel %vm19, %v60, %v62
    %v65 = vsel %vm20, %v61, %v63
    %v66 = vmax.f32 %v64, 0.0001
    %v67 = vmax.f32 %v65, 0.0001
    %v68 = vmin.f32 %v66, 0.9999
    %v69 = vmin.f32 %v67, 0.9999
    %v70 = vsub.f32 1.0, %v68
    %v71 = vsub.f32 1.0, %v69
    %v72 = vmul.f32 %v70, %v70
    %v73 = vmul.f32 %v71, %v71
    %v74 = vmul.f32 %v72, -1.0
    %v75 = vmul.f32 %v73, -1.0
    %v76 = vlog2.pop %v68
    %v77 = vmul.f32 %v76, 0.6931472
    %v78 = vlog2.pop %v69
    %v79 = vmul.f32 %v78, 0.6931472
    %v80 = vmul.f32 %v74, %v77
    %v81 = vmul.f32 %v75, %v79
    %v82 = vsel %vm21, %v80, 0.0
    %v83 = vsel %vm21, %v81, 0.0
    %v84 = vadd.f32 %v82, %v83
    %v85 = vrot.slane %v84, 4
    %v86 = vadd.f32 %v84, %v85
    %v87 = vrot.slane %v86, 2
    %v88 = vadd.f32 %v86, %v87
    %v89 = vrot.slane %v88, 1
    %v90 = vadd.f32 %v88, %v89
    %v91 = vsel %vm21, %v90, 0.0
    %92 = vadd.xlane.f32.xlu0 %v91
    %v93 = vpop.xlane.xlu0 %92
    %v94 = vadd.f32 %v93, 0.0
    %vm95 = vcmask 0
    %96 = vst.msk [vmem:[#allocation2] sm:$0x1] %vm95, %v94
    // Predicated region
    $region10: #{tpu_custom_call.1} parent=1 // pred_check
      _
    $region11: #{tpu_custom_call.1} parent=1 // pred_check_branch
      %98 = sbr.rel (0) target = $region13
    $region12: #{tpu_custom_call.1} parent=1 // pred_region
      %100 = vsyncadd [#allocation3], 0
      %s102 = sshll.u32 [#allocation2], 4
      %s103 = int_to_ptr.vmem [resolvable:$true] %s102
      %s104 = sshll.u32 %s2, 4
      %s105 = int_to_ptr.hbm [resolvable:$true] %s104
      %107 = dma.vmem_to_hbm [thread:$0]  %s103, 16, %s105, [#allocation3]
    $region13: #{tpu_custom_call.1} parent=1 // pred_fallthru
      _
    // Predicated region
    $region14: #{tpu_custom_call.1} parent=1 // pred_check
      _
    $region15: #{tpu_custom_call.1} parent=1 // pred_check_branch
      %109 = sbr.rel (0) target = $region17
    $region16: #{tpu_custom_call.1} parent=1 // pred_region
      %111 = dma.done [#allocation3], 16
    $region17: #{tpu_custom_call.1} parent=1 // pred_fallthru
      _
    %112 = vsyncpa [#allocation3], 1

</llo_original>
